<compile_context>
chip_gen: v7x
topology: tpu7x:2x2x1
jax: 0.10.0
libtpu: 0.0.40
codegen_flags: <defaults>
</compile_context>

<pallas_src>
import functools

import jax
import jax.numpy as jnp
from jax.experimental import pallas as pl
from jax.experimental.pallas import tpu as pltpu


def _label_smoothing_kernel(tgt_ref, logits_ref, sum_ref, cnt_ref,
                            *, smoothing, off_val, sentinel):
    x = logits_ref[...].astype(jnp.float32)          # (TN, V)
    tgt = tgt_ref[...]                               # (TN, 1) int32
    v_logits = x.shape[-1]

    # log-sum-exp per row (lane reductions on the XLU)
    m = jnp.max(x, axis=-1, keepdims=True)
    lse = m + jnp.log(jnp.sum(jnp.exp(x - m), axis=-1, keepdims=True))

    # target logit per row via masked lane sum (no one-hot materialization)
    iota = jax.lax.broadcasted_iota(jnp.int32, x.shape, 1)
    x_t = jnp.sum(jnp.where(iota == tgt, x, 0.0), axis=-1, keepdims=True)

    # loss = -(off_val*(sum_x - V*lse) + (1 - smoothing - off_val)*(x_t - lse))
    on_coeff = 1.0 - smoothing - off_val
    if off_val != 0.0:
        sum_x = jnp.sum(x, axis=-1, keepdims=True)
        smooth_term = off_val * (sum_x - float(v_logits) * lse)
    else:  # smoothing == 0 reduces exactly to NLL
        smooth_term = 0.0
    loss = -(smooth_term + on_coeff * (x_t - lse))   # (TN, 1)

    # sentinel marks ignore_index rows and padded rows
    mask = (tgt != sentinel).astype(jnp.float32)

    # per-block partial sums (one (1,1,1) block per grid step -> parallel grid)
    sum_ref[...] = jnp.sum(loss * mask).reshape(1, 1, 1)
    cnt_ref[...] = jnp.sum(mask).reshape(1, 1, 1)


def _pick_row_tile(n, v, itemsize, vmem_budget_bytes=8 * 1024 * 1024):
    """Largest sublane-multiple row tile whose double-buffered logits tile
    fits the budget (conservative for v7x's 64 MiB VMEM)."""
    sublane = 8 if itemsize >= 4 else 16
    per_row = 2 * v * itemsize                       # double-buffered logits row
    t = max(sublane, (vmem_budget_bytes // per_row) // sublane * sublane)
    t = min(t, 512)
    n_rounded = -(-n // sublane) * sublane           # don't pad far beyond N
    return max(sublane, min(t, n_rounded))


def label_smoothing_loss(logits, target, *, smoothing=0.0, vocab_size=None,
                         ignore_index=None, row_tile=None):
    """logits: (B, S, V) float (f32 or bf16), target: (B, S) int -> scalar f32."""
    if smoothing > 0 and (vocab_size is None or ignore_index is None):
        raise ValueError(
            "vocab_size and ignore_index must be provided for label smoothing.")

    B, S, V = logits.shape
    N = B * S
    logits2d = logits.reshape(N, V)
    tgt2d = target.reshape(N, 1).astype(jnp.int32)

    if row_tile is None:
        row_tile = _pick_row_tile(N, V, logits2d.dtype.itemsize)

    # sentinel: rows with this target are excluded from the mean
    sentinel = int(ignore_index) if ignore_index is not None else -1

    # pad the row count up to a multiple of row_tile with masked-out rows
    n_pad = -(-N // row_tile) * row_tile
    if n_pad != N:
        logits2d = jnp.pad(logits2d, ((0, n_pad - N), (0, 0)))
        tgt2d = jnp.pad(tgt2d, ((0, n_pad - N), (0, 0)),
                        constant_values=sentinel)
    grid = n_pad // row_tile

    # smoothing mass uses the true class count (module's vocab_size), not the
    # (possibly padded) logits width.
    num_classes = vocab_size if (smoothing > 0 and vocab_size is not None) else V
    off_val = float(smoothing) / (num_classes - 1) if smoothing > 0 else 0.0

    kernel = functools.partial(
        _label_smoothing_kernel,
        smoothing=float(smoothing),
        off_val=off_val,
        sentinel=sentinel,
    )

    sums, cnts = pl.pallas_call(
        kernel,
        out_shape=(
            jax.ShapeDtypeStruct((grid, 1, 1), jnp.float32),
            jax.ShapeDtypeStruct((grid, 1, 1), jnp.float32),
        ),
        grid_spec=pltpu.PrefetchScalarGridSpec(
            num_scalar_prefetch=0,
            grid=(grid,),
            in_specs=[
                pl.BlockSpec((row_tile, 1), lambda i: (i, 0)),   # targets
                pl.BlockSpec((row_tile, V), lambda i: (i, 0)),   # logits
            ],
            out_specs=(
                pl.BlockSpec((1, 1, 1), lambda i: (i, 0, 0)),    # partial sums
                pl.BlockSpec((1, 1, 1), lambda i: (i, 0, 0)),    # partial counts
            ),
        ),
        compiler_params=pltpu.CompilerParams(
            dimension_semantics=("parallel",),
            vmem_limit_bytes=32 * 1024 * 1024,
        ),
    )(tgt2d, logits2d)

    total = jnp.sum(sums)
    count = jnp.sum(cnts)
    # NOTE: if every target equals ignore_index, count == 0 and this yields
    # NaN, matching PyTorch's mean over an empty masked_select.
    return (total / count).astype(jnp.float32)


def _reference_loss(logits, target, *, smoothing, vocab_size, ignore_index):
    """Pure-JAX reference mirroring the PyTorch module."""
    V = logits.shape[-1]
    logits = logits.reshape(-1, V).astype(jnp.float32)
    target = target.reshape(-1)
    log_probs = jax.nn.log_softmax(logits, axis=-1)
    if smoothing > 0:
        one_hot = jax.nn.one_hot(target, V, dtype=jnp.float32)
        smoothed = one_hot * (1 - smoothing) + (1 - one_hot) * smoothing / (vocab_size - 1)
        loss = -(smoothed * log_probs).sum(axis=-1)
    else:
        loss = -jnp.take_along_axis(log_probs, target[:, None], axis=-1)[:, 0]
    if ignore_index is not None:
        mask = (target != ignore_index).astype(jnp.float32)
        return (loss * mask).sum() / mask.sum()
    return loss.mean()


if __name__ == "__main__":
    key = jax.random.PRNGKey(0)

    # Case 1: label smoothing + ignore_index (batch=2, seq=8, vocab=128)
    B, S, V = 2, 8, 128
    SMOOTHING = 0.1
    IGNORE_INDEX = 0
    k_logits, k_tgt, key = jax.random.split(key, 3)
    logits = jax.random.normal(k_logits, (B, S, V), dtype=jnp.float32)
    target = jax.random.randint(k_tgt, (B, S), 0, V, dtype=jnp.int32)

    loss = label_smoothing_loss(
        logits, target,
        smoothing=SMOOTHING, vocab_size=V, ignore_index=IGNORE_INDEX)
    loss = jax.block_until_ready(loss)
    ref = _reference_loss(
        logits, target,
        smoothing=SMOOTHING, vocab_size=V, ignore_index=IGNORE_INDEX)
    ref = jax.block_until_ready(ref)
    assert jnp.allclose(loss, ref, rtol=1e-4, atol=1e-4), (loss, ref)

    # Case 2: plain cross-entropy (smoothing=0, no ignore_index), non-aligned
    # row count (exercises the sentinel-padding path)
    B2, S2, V2 = 2, 7, 128
    k_logits2, k_tgt2, key = jax.random.split(key, 3)
    logits2 = jax.random.normal(k_logits2, (B2, S2, V2), dtype=jnp.float32)
    target2 = jax.random.randint(k_tgt2, (B2, S2), 0, V2, dtype=jnp.int32)

    loss2 = label_smoothing_loss(logits2, target2, smoothing=0.0,
                                 vocab_size=None, ignore_index=None)
    loss2 = jax.block_until_ready(loss2)
    ref2 = _reference_loss(logits2, target2, smoothing=0.0,
                           vocab_size=None, ignore_index=None)
    ref2 = jax.block_until_ready(ref2)
    assert jnp.allclose(loss2, ref2, rtol=1e-4, atol=1e-4), (loss2, ref2)

    print("KERNEL_OK")
</pallas_src>

<mosaic_0001>
module attributes {stable_mosaic.version = 11 : i64} {
  func.func @_label_smoothing_kernel(%arg0: i32, %arg1: memref<16x1xi32, #tpu.memory_space<vmem>>, %arg2: memref<16x128xf32, #tpu.memory_space<vmem>>, %arg3: memref<1x1x1xf32, #tpu.memory_space<vmem>>, %arg4: memref<1x1x1xf32, #tpu.memory_space<vmem>>) attributes {dimension_semantics = [#tpu.dimension_semantics<parallel>], iteration_bounds = array<i64: 1>, scalar_prefetch = 0 : i64, scratch_operands = 0 : i64, tpu.core_type = #tpu.core_type<tc>, window_params = [{transform_indices = @transform_0, window_bounds = array<i64: 16, 1>}, {transform_indices = @transform_1, window_bounds = array<i64: 16, 128>}, {transform_indices = @transform_2, window_bounds = array<i64: 1, 1, 1>}, {transform_indices = @transform_3, window_bounds = array<i64: 1, 1, 1>}]} {
    %c0 = arith.constant 0 : index
    %c0_0 = arith.constant 0 : index
    %0 = vector.load %arg2[%c0, %c0_0] : memref<16x128xf32, #tpu.memory_space<vmem>>, vector<16x128xf32>
    %c0_1 = arith.constant 0 : index
    %c0_2 = arith.constant 0 : index
    %1 = vector.load %arg1[%c0_1, %c0_2] : memref<16x1xi32, #tpu.memory_space<vmem>>, vector<16x1xi32>
    %cst = arith.constant dense<0xFF800000> : vector<16xf32>
    %2 = vector.multi_reduction <maximumf>, %0, %cst [1] : vector<16x128xf32> to vector<16xf32>
    %3 = vector.shape_cast %2 : vector<16xf32> to vector<16x1xf32>
    %4 = vector.broadcast %3 : vector<16x1xf32> to vector<16x128xf32>
    %5 = arith.subf %0, %4 : vector<16x128xf32>
    %6 = math.exp %5 : vector<16x128xf32>
    %cst_3 = arith.constant dense<0.000000e+00> : vector<16xf32>
    %7 = vector.multi_reduction <add>, %6, %cst_3 [1] : vector<16x128xf32> to vector<16xf32>
    %8 = vector.shape_cast %7 : vector<16xf32> to vector<16x1xf32>
    %9 = math.log %8 : vector<16x1xf32>
    %10 = arith.addf %3, %9 : vector<16x1xf32>
    %11 = tpu.iota {dimensions = array<i32: 1>} : vector<16x128xi32>
    %12 = vector.broadcast %1 : vector<16x1xi32> to vector<16x128xi32>
    %13 = arith.cmpi eq, %11, %12 : vector<16x128xi32>
    %cst_4 = arith.constant 0.000000e+00 : f32
    %14 = vector.broadcast %cst_4 : f32 to vector<16x128xf32>
    %15 = arith.select %13, %0, %14 : vector<16x128xi1>, vector<16x128xf32>
    %cst_5 = arith.constant dense<0.000000e+00> : vector<16xf32>
    %16 = vector.multi_reduction <add>, %15, %cst_5 [1] : vector<16x128xf32> to vector<16xf32>
    %17 = vector.shape_cast %16 : vector<16xf32> to vector<16x1xf32>
    %cst_6 = arith.constant dense<0.000000e+00> : vector<16xf32>
    %18 = vector.multi_reduction <add>, %0, %cst_6 [1] : vector<16x128xf32> to vector<16xf32>
    %19 = vector.shape_cast %18 : vector<16xf32> to vector<16x1xf32>
    %cst_7 = arith.constant 1.280000e+02 : f32
    %20 = vector.broadcast %cst_7 : f32 to vector<16x1xf32>
    %21 = arith.mulf %20, %10 : vector<16x1xf32>
    %22 = arith.subf %19, %21 : vector<16x1xf32>
    %cst_8 = arith.constant 7.87401571E-4 : f32
    %23 = vector.broadcast %cst_8 : f32 to vector<16x1xf32>
    %24 = arith.mulf %23, %22 : vector<16x1xf32>
    %25 = arith.subf %17, %10 : vector<16x1xf32>
    %cst_9 = arith.constant 0.899212599 : f32
    %26 = vector.broadcast %cst_9 : f32 to vector<16x1xf32>
    %27 = arith.mulf %26, %25 : vector<16x1xf32>
    %28 = arith.addf %24, %27 : vector<16x1xf32>
    %cst_10 = arith.constant 0.000000e+00 : f32
    %29 = vector.broadcast %cst_10 : f32 to vector<16x1xf32>
    %30 = arith.subf %29, %28 : vector<16x1xf32>
    %c0_i32 = arith.constant 0 : i32
    %31 = vector.broadcast %c0_i32 : i32 to vector<16x1xi32>
    %32 = arith.cmpi ne, %1, %31 : vector<16x1xi32>
    %33 = arith.extui %32 : vector<16x1xi1> to vector<16x1xi32>
    %34 = arith.sitofp %33 : vector<16x1xi32> to vector<16x1xf32>
    %35 = arith.mulf %30, %34 : vector<16x1xf32>
    %36 = vector.shape_cast %35 : vector<16x1xf32> to vector<1x16x1xf32>
    %cst_11 = arith.constant dense<0.000000e+00> : vector<1xf32>
    %37 = vector.multi_reduction <add>, %36, %cst_11 [1, 2] : vector<1x16x1xf32> to vector<1xf32>
    %38 = vector.shape_cast %37 : vector<1xf32> to vector<1x1x1xf32>
    %39 = vector.extract %38[0, 0, 0] : f32 from vector<1x1x1xf32>
    %40 = vector.broadcast %39 : f32 to vector<1x1x1xf32>
    %c0_12 = arith.constant 0 : index
    %c0_13 = arith.constant 0 : index
    %c0_14 = arith.constant 0 : index
    %41 = vector.load %arg3[%c0_12, %c0_13, %c0_14] : memref<1x1x1xf32, #tpu.memory_space<vmem>>, vector<1x1x1xf32>
    tpu.vector_store %arg3[%c0_12, %c0_13, %c0_14], %40 {strides = array<i32>} : memref<1x1x1xf32, #tpu.memory_space<vmem>>, vector<1x1x1xf32>,
    %42 = vector.shape_cast %34 : vector<16x1xf32> to vector<1x16x1xf32>
    %cst_15 = arith.constant dense<0.000000e+00> : vector<1xf32>
    %43 = vector.multi_reduction <add>, %42, %cst_15 [1, 2] : vector<1x16x1xf32> to vector<1xf32>
    %44 = vector.shape_cast %43 : vector<1xf32> to vector<1x1x1xf32>
    %45 = vector.extract %44[0, 0, 0] : f32 from vector<1x1x1xf32>
    %46 = vector.broadcast %45 : f32 to vector<1x1x1xf32>
    %c0_16 = arith.constant 0 : index
    %c0_17 = arith.constant 0 : index
    %c0_18 = arith.constant 0 : index
    %47 = vector.load %arg4[%c0_16, %c0_17, %c0_18] : memref<1x1x1xf32, #tpu.memory_space<vmem>>, vector<1x1x1xf32>
    tpu.vector_store %arg4[%c0_16, %c0_17, %c0_18], %46 {strides = array<i32>} : memref<1x1x1xf32, #tpu.memory_space<vmem>>, vector<1x1x1xf32>,
    return
  }
  func.func @transform_0(%arg0: i32) -> (i32, i32) {
    %c0_i32 = arith.constant 0 : i32
    %c0_i32_0 = arith.constant 0 : i32
    return %arg0, %c0_i32 : i32, i32
  }
  func.func @transform_1(%arg0: i32) -> (i32, i32) {
    %c0_i32 = arith.constant 0 : i32
    %c0_i32_0 = arith.constant 0 : i32
    return %arg0, %c0_i32 : i32, i32
  }
  func.func @transform_2(%arg0: i32) -> (i32, i32, i32) {
    %c0_i32 = arith.constant 0 : i32
    %c0_i32_0 = arith.constant 0 : i32
    %c0_i32_1 = arith.constant 0 : i32
    return %arg0, %c0_i32, %c0_i32_0 : i32, i32, i32
  }
  func.func @transform_3(%arg0: i32) -> (i32, i32, i32) {
    %c0_i32 = arith.constant 0 : i32
    %c0_i32_0 = arith.constant 0 : i32
    %c0_i32_1 = arith.constant 0 : i32
    return %arg0, %c0_i32, %c0_i32_0 : i32, i32, i32
  }
}

</mosaic_0001>

<llo_original>
// kernel: tpu_custom_call.1
$region0: #{tpu_custom_call.1}
  #allocation0 [shape = 'u32[]', space=smem, size = 0x4, offset = 0x4, fixed_abs, tag = 'smem constant byte address 0x4 - core index']
  #allocation1 [shape = 'u32[144,128]{1,0:T(1,128)}', space=vmem, size = 0x12000, scoped, tag = 'internal scratch']
  %s0 = inlined_call_operand.vmem [shape: s32[16,1], index: 0, kind: input, shape index: {}]
  %s1 = inlined_call_operand.vmem [shape: f32[16,128], index: 1, kind: input, shape index: {}]
  %s2 = inlined_call_operand.hbm [shape: f32[1,1,1], index: 2, kind: output, shape index: {0}]
  %s3 = inlined_call_operand.hbm [shape: f32[1,1,1], index: 3, kind: output, shape index: {1}]
  %4 = xla_tuple %s2, %s3
  %s5 = sld [smem:[#allocation0]]
  $region26: #{tpu_custom_call.1} parent=0
    _
  %s7 = ssub.s32 1, %s5
  %s8 = scalar_select 0, %s7, %s5
  $region1: #{tpu_custom_call.1} parent=0
    #allocation2 [shape = 'u8[512]{0}', space=vmem, size = 0x400, scoped, tag = 'output window, operand 0, single buffered']
    #allocation3 [shape = 's32[1]{0}', space=sflag, size = 0x4, scoped, tag = 'scoped memory for tpu_custom_call.1']
    #allocation4 [shape = 'u8[512]{0}', space=vmem, size = 0x400, scoped, tag = 'output window, operand 1, single buffered']
    #allocation5 [shape = 's32[1]{0}', space=sflag, size = 0x4, scoped, tag = 'scoped memory for tpu_custom_call.1']
    %9 = vsyncpa [#allocation3], 0
    %10 = vsyncpa [#allocation5], 0
    // Predicated region
    $region2: #{tpu_custom_call.1} parent=1 // pred_check
      _
    $region3: #{tpu_custom_call.1} parent=1 // pred_check_branch
      %12 = sbr.rel (0) target = $region5
    $region4: #{tpu_custom_call.1} parent=1 // pred_region
      _
    $region5: #{tpu_custom_call.1} parent=1 // pred_fallthru
      _
    // Predicated region
    $region6: #{tpu_custom_call.1} parent=1 // pred_check
      _
    $region7: #{tpu_custom_call.1} parent=1 // pred_check_branch
      %14 = sbr.rel (0) target = $region9
    $region8: #{tpu_custom_call.1} parent=1 // pred_region
      _
    $region9: #{tpu_custom_call.1} parent=1 // pred_fallthru
      _
    %v15 = vld [vmem:[%s1] sm:$0xff]
    %v16 = vld [vmem:[%s1 + $0x8] sm:$0xff]
    %v17 = vld [vmem:[%s0] sm:$0xff]
    %v18 = vld [vmem:[%s0 + $0x8] sm:$0xff]
    %19 = vmax.xlane.f32.xlu0 %v15
    %v20 = vpop.xlane.xlu0 %19
    %21 = vmax.xlane.f32.xlu0 %v16
    %v22 = vpop.xlane.xlu0 %21
    %v23 = vsub.f32 %v15, %v20
    %v24 = vsub.f32 %v16, %v22
    %v25 = vmul.f32 %v23, 1.442695
    %v26 = vpow.pop %v25
    %v27 = vmul.f32 %v24, 1.442695
    %v28 = vpow.pop %v27
    %29 = vadd.xlane.f32.xlu0 %v26
    %v30 = vpop.xlane.xlu0 %29
    %31 = vadd.xlane.f32.xlu0 %v28
    %v32 = vpop.xlane.xlu0 %31
    %v33 = vlog2.pop %v30
    %v34 = vmul.f32 %v33, 0.6931472
    %v35 = vlog2.pop %v32
    %v36 = vmul.f32 %v35, 0.6931472
    %v37 = vadd.f32 %v20, %v34
    %v38 = vadd.f32 %v22, %v36
    %v39 = vlaneseq
    %v40 = vand.u32 %v39, 127
    %41 = vset.pattern.permute.xlu0 0
    %42 = vperm.xlu0 %41, %v17
    %v43 = vpop.permute.xlu0 %42
    %44 = vset.pattern.permute.xlu0 0
    %45 = vperm.xlu0 %44, %v18
    %v46 = vpop.permute.xlu0 %45
    %vm47 = vcmp.eq.s32.totalorder %v40, %v43
    %vm48 = vcmp.eq.s32.totalorder %v40, %v46
    %v49 = vsel %vm47, %v15, 0.0
    %v50 = vsel %vm48, %v16, 0.0
    %51 = vadd.xlane.f32.xlu0 %v49
    %v52 = vpop.xlane.xlu0 %51
    %53 = vadd.xlane.f32.xlu0 %v50
    %v54 = vpop.xlane.xlu0 %53
    %55 = vadd.xlane.f32.xlu0 %v15
    %v56 = vpop.xlane.xlu0 %55
    %57 = vadd.xlane.f32.xlu0 %v16
    %v58 = vpop.xlane.xlu0 %57
    %v59 = vmul.f32 %v37, 128.0
    %v60 = vmul.f32 %v38, 128.0
    %v61 = vsub.f32 %v56, %v59
    %v62 = vsub.f32 %v58, %v60
    %v63 = vmul.f32 %v61, 0.0007874016
    %v64 = vmul.f32 %v62, 0.0007874016
    %v65 = vsub.f32 %v52, %v37
    %v66 = vsub.f32 %v54, %v38
    %v67 = vmul.f32 %v65, 0.8992126
    %v68 = vmul.f32 %v66, 0.8992126
    %v69 = vadd.f32 %v63, %v67
    %v70 = vadd.f32 %v64, %v68
    %v71 = vsub.f32 0.0, %v69
    %v72 = vsub.f32 0.0, %v70
    %vm73 = vcmp.ne.s32.totalorder %v17, 0
    %vm74 = vcmp.ne.s32.totalorder %v18, 0
    %v75 = vsel %vm73, 1, 0
    %v76 = vsel %vm74, 1, 0
    %v77 = vcvt.s32.f32 %v75
    %v78 = vcvt.s32.f32 %v76
    %v79 = vmul.f32 %v71, %v77
    %v80 = vmul.f32 %v72, %v78
    %vm81 = vcmask 7168
    %v82 = vsel %vm81, %v79, 0.0
    %v83 = vsel %vm81, %v80, 0.0
    %v84 = vadd.f32 %v82, %v83
    %85 = vadd.xlane.f32.xlu0 %v84
    %v86 = vpop.xlane.xlu0 %85
    %v87 = vrot.slane %v86, 4
    %v88 = vadd.f32 %v86, %v87
    %v89 = vrot.slane %v88, 2
    %v90 = vadd.f32 %v88, %v89
    %v91 = vrot.slane %v90, 1
    %v92 = vadd.f32 %v90, %v91
    %s93 = vtos %v92
    %v94 = vstv %s93
    %vm95 = vcmask 0
    %96 = vst.msk [vmem:[#allocation2] sm:$0x1] %vm95, %v94
    %v97 = vsel %vm81, %v77, 0.0
    %v98 = vsel %vm81, %v78, 0.0
    %v99 = vadd.f32 %v97, %v98
    %100 = vadd.xlane.f32.xlu0 %v99
    %v101 = vpop.xlane.xlu0 %100
    %v102 = vrot.slane %v101, 4
    %v103 = vadd.f32 %v101, %v102
    %v104 = vrot.slane %v103, 2
    %v105 = vadd.f32 %v103, %v104
    %v106 = vrot.slane %v105, 1
    %v107 = vadd.f32 %v105, %v106
    %s108 = vtos %v107
    %v109 = vstv %s108
    %110 = vst.msk [vmem:[#allocation4] sm:$0x1] %vm95, %v109
    // Predicated region
    $region10: #{tpu_custom_call.1} parent=1 // pred_check
      _
    $region11: #{tpu_custom_call.1} parent=1 // pred_check_branch
      %112 = sbr.rel (0) target = $region13
    $region12: #{tpu_custom_call.1} parent=1 // pred_region
      %s114 = ssub.s32 16, 16
      %115 = vsyncadd [#allocation3], %s114
      %s117 = sshll.u32 [#allocation2], 4
      %s118 = int_to_ptr.vmem [resolvable:$true] %s117
      %120 = dma.vmem_to_hbm [thread:$0]  %s118, 16, %s2, [#allocation3]
    $region13: #{tpu_custom_call.1} parent=1 // pred_fallthru
      _
    // Predicated region
    $region14: #{tpu_custom_call.1} parent=1 // pred_check
      _
    $region15: #{tpu_custom_call.1} parent=1 // pred_check_branch
      %122 = sbr.rel (0) target = $region17
    $region16: #{tpu_custom_call.1} parent=1 // pred_region
      %s124 = ssub.s32 16, 16
      %125 = vsyncadd [#allocation5], %s124
      %s127 = sshll.u32 [#allocation4], 4
      %s128 = int_to_ptr.vmem [resolvable:$true] %s127
      %130 = dma.vmem_to_hbm [thread:$0]  %s128, 16, %s3, [#allocation5]
    $region17: #{tpu_custom_call.1} parent=1 // pred_fallthru
      _
    // Predicated region
    $region18: #{tpu_custom_call.1} parent=1 // pred_check
      _
    $region19: #{tpu_custom_call.1} parent=1 // pred_check_branch
      %132 = sbr.rel (0) target = $region21
    $region20: #{tpu_custom_call.1} parent=1 // pred_region
      %133 = dma.done [#allocation3], 16
    $region21: #{tpu_custom_call.1} parent=1 // pred_fallthru
      _
    // Predicated region
    $region22: #{tpu_custom_call.1} parent=1 // pred_check
      _
    $region23: #{tpu_custom_call.1} parent=1 // pred_check_branch
      %135 = sbr.rel (0) target = $region25
    $region24: #{tpu_custom_call.1} parent=1 // pred_region
      %136 = dma.done [#allocation5], 16
    $region25: #{tpu_custom_call.1} parent=1 // pred_fallthru
      _
    %137 = vsyncpa [#allocation3], 1
    %138 = vsyncpa [#allocation5], 1

</llo_original>
